<compile_context>
chip_gen: v5e
topology: v5e:2x2
jax: 0.10.0
libtpu: 0.0.40
codegen_flags: <defaults>
</compile_context>

<pallas_src>
import jax
import jax.numpy as jnp
from jax.experimental import pallas as pl
from jax.experimental.pallas import tpu as pltpu


def _round_up(n, m):
    return ((n + m - 1) // m) * m


def _make_qnetwork_kernel(num_layers):
    """Fused MLP kernel: refs = (xT, w1, b1, ..., wN, bN, oT).

    Python loop is unrolled at trace time; all matmuls hit the MXU with bf16
    operands and f32 accumulation, ReLU / bias-add run on the VPU in f32.
    """

    def kernel(*refs):
        xT_ref = refs[0]
        oT_ref = refs[-1]
        param_refs = refs[1:-1]

        h = xT_ref[...]                                   # (d_in, TB) bf16
        for li in range(num_layers):
            w = param_refs[2 * li][...]                   # (d_out, d_in) bf16
            b = param_refs[2 * li + 1][...]               # (d_out, 1)    f32
            y = jnp.dot(w, h, preferred_element_type=jnp.float32) + b
            if li < num_layers - 1:
                h = jnp.maximum(y, 0.0).astype(jnp.bfloat16)   # ReLU, back to MXU dtype
            else:
                oT_ref[...] = y.astype(oT_ref.dtype)

    return kernel


def qnetwork_forward(x, params_raw, batch_tile=512):
    """x: (B, input_size) f32; params_raw: list of (W (out, in), b (out,)).

    Returns (B, output_size) f32, matching the PyTorch forward.
    """
    layer_dims = [(int(W.shape[1]), int(W.shape[0])) for W, _ in params_raw]
    num_layers = len(layer_dims)
    d_in = layer_dims[0][0]
    d_out = layer_dims[-1][1]

    B = int(x.shape[0])
    # Batch tile: multiple of 128 (lane width), no larger than needed.
    tb = max(128, min(_round_up(int(batch_tile), 128), _round_up(B, 128)))
    b_pad = _round_up(B, tb)
    n_tiles = b_pad // tb

    # Lane-dense layout: features on sublanes, (padded) batch on lanes; bf16
    # halves the activation DMA bytes since x only feeds the MXU.
    xT = jnp.zeros((d_in, b_pad), jnp.bfloat16).at[:, :B].set(
        x.astype(jnp.bfloat16).T)

    # Params: weights bf16 (out, in), biases f32 (out, 1) for lane broadcast.
    flat_params = []
    for W, b in params_raw:
        flat_params.append(W.astype(jnp.bfloat16))
        flat_params.append(b.astype(jnp.float32).reshape(-1, 1))

    # x tiled on batch (lane axis); params full-array + constant block index
    # -> resident in VMEM (fetched once, not re-DMA'd per grid step).
    in_specs = [pl.BlockSpec((d_in, tb), lambda i: (0, i))]
    for p in flat_params:
        in_specs.append(pl.BlockSpec(p.shape, lambda i: (0, 0)))

    kernel = _make_qnetwork_kernel(num_layers)

    flops = 2 * b_pad * sum(di * do for di, do in layer_dims)
    bytes_accessed = (xT.size * 2
                      + sum(int(p.size) * p.dtype.itemsize for p in flat_params)
                      + b_pad * d_out * 4)

    outT = pl.pallas_call(
        kernel,
        out_shape=jax.ShapeDtypeStruct((d_out, b_pad), jnp.float32),
        grid_spec=pltpu.PrefetchScalarGridSpec(
            num_scalar_prefetch=0,
            grid=(n_tiles,),
            in_specs=in_specs,
            out_specs=pl.BlockSpec((d_out, tb), lambda i: (0, i)),
        ),
        compiler_params=pltpu.CompilerParams(
            dimension_semantics=("parallel",)),   # v7x: shard batch over 2 TCs
        cost_estimate=pl.CostEstimate(
            flops=flops, transcendentals=0, bytes_accessed=bytes_accessed),
    )(xT, *flat_params)

    # Back to PyTorch-facing (B, output_size) layout; drop batch padding.
    return outT[:, :B].T


def make_params(key, input_size, fc, output_size):
    """Synthetic params mirroring the PyTorch _make_layers logic.

    fc_list = [input_size] + fc; Linear(fc_list[i], fc_list[i+1]) + ReLU until
    fc_list[i] == fc_list[-1], then Linear(fc_list[i], output_size).
    Weights kept PyTorch-native as (out, in); biases as (out,).
    """
    dims = []
    fc_list = [input_size] + list(fc)
    for i, f_ in enumerate(fc_list):
        if fc_list[i] == fc_list[-1]:
            dims.append((f_, output_size))
            break
        dims.append((f_, fc_list[i + 1]))

    params = []
    keys = jax.random.split(key, 2 * len(dims))
    for li, (din, dout) in enumerate(dims):
        bound = 1.0 / (float(din) ** 0.5)  # PyTorch default Linear init range
        W = jax.random.uniform(keys[2 * li], (dout, din), jnp.float32,
                               minval=-bound, maxval=bound)
        b = jax.random.uniform(keys[2 * li + 1], (dout,), jnp.float32,
                               minval=-bound, maxval=bound)
        params.append((W, b))
    return params


def qnetwork_reference(x, params_raw):
    """Pure-JAX reference with the same bf16-MXU / f32-elementwise recipe."""
    h = x
    n = len(params_raw)
    for i, (W, b) in enumerate(params_raw):
        y = jnp.dot(h.astype(jnp.bfloat16), W.astype(jnp.bfloat16).T,
                    preferred_element_type=jnp.float32) + b[None, :]
        h = jnp.maximum(y, 0.0) if i < n - 1 else y
    return h


if __name__ == "__main__":
    input_size = 16
    output_size = 4
    configs = {"fc": [32, 64]}
    batch = 256  # >=128 so stores are lane-dense; 2 grid steps @ tile 128

    key = jax.random.PRNGKey(0)
    kx, kp = jax.random.split(key)
    x = jax.random.normal(kx, (batch, input_size), jnp.float32)
    params = make_params(kp, input_size, configs["fc"], output_size)

    out = qnetwork_forward(x, params, batch_tile=128)
    out = jax.block_until_ready(out)

    ref = qnetwork_reference(x, params)
    assert out.shape == (batch, output_size)
    max_err = float(jnp.max(jnp.abs(out - ref)))
    assert jnp.allclose(out, ref, atol=5e-3, rtol=5e-3), (
        f"mismatch vs reference, max abs err = {max_err}")

    print("KERNEL_OK")
</pallas_src>

<mosaic_0001>
module attributes {stable_mosaic.version = 11 : i64} {
  func.func @kernel(%arg0: i32, %arg1: memref<16x128xbf16, #tpu.memory_space<vmem>>, %arg2: memref<32x16xbf16, #tpu.memory_space<vmem>>, %arg3: memref<32x1xf32, #tpu.memory_space<vmem>>, %arg4: memref<64x32xbf16, #tpu.memory_space<vmem>>, %arg5: memref<64x1xf32, #tpu.memory_space<vmem>>, %arg6: memref<4x64xbf16, #tpu.memory_space<vmem>>, %arg7: memref<4x1xf32, #tpu.memory_space<vmem>>, %arg8: memref<4x128xf32, #tpu.memory_space<vmem>>) attributes {dimension_semantics = [#tpu.dimension_semantics<parallel>], iteration_bounds = array<i64: 2>, scalar_prefetch = 0 : i64, scratch_operands = 0 : i64, tpu.core_type = #tpu.core_type<tc>, window_params = [{transform_indices = @transform_0, window_bounds = array<i64: 16, 128>}, {pipeline_mode = #tpu.pipeline_mode<synchronous>, transform_indices = @transform_1, window_bounds = array<i64: 32, 16>}, {pipeline_mode = #tpu.pipeline_mode<synchronous>, transform_indices = @transform_2, window_bounds = array<i64: 32, 1>}, {pipeline_mode = #tpu.pipeline_mode<synchronous>, transform_indices = @transform_3, window_bounds = array<i64: 64, 32>}, {pipeline_mode = #tpu.pipeline_mode<synchronous>, transform_indices = @transform_4, window_bounds = array<i64: 64, 1>}, {pipeline_mode = #tpu.pipeline_mode<synchronous>, transform_indices = @transform_5, window_bounds = array<i64: 4, 64>}, {pipeline_mode = #tpu.pipeline_mode<synchronous>, transform_indices = @transform_6, window_bounds = array<i64: 4, 1>}, {transform_indices = @transform_7, window_bounds = array<i64: 4, 128>}]} {
    %c0 = arith.constant 0 : index
    %c0_0 = arith.constant 0 : index
    %0 = vector.load %arg1[%c0, %c0_0] : memref<16x128xbf16, #tpu.memory_space<vmem>>, vector<16x128xbf16>
    %c0_1 = arith.constant 0 : index
    %c0_2 = arith.constant 0 : index
    %1 = vector.load %arg2[%c0_1, %c0_2] : memref<32x16xbf16, #tpu.memory_space<vmem>>, vector<32x16xbf16>
    %c0_3 = arith.constant 0 : index
    %c0_4 = arith.constant 0 : index
    %2 = vector.load %arg3[%c0_3, %c0_4] : memref<32x1xf32, #tpu.memory_space<vmem>>, vector<32x1xf32>
    %cst = arith.constant dense<0.000000e+00> : vector<32x128xf32>
    %3 = tpu.matmul %1, %0, %cst {dimension_numbers = #tpu.dot_dimension_numbers<[1], [0], [0], [1], [0, 0, 1, 1], [], []>} : vector<32x16xbf16>, vector<16x128xbf16>, vector<32x128xf32> -> vector<32x128xf32>
    %4 = vector.broadcast %2 : vector<32x1xf32> to vector<32x128xf32>
    %5 = arith.addf %3, %4 : vector<32x128xf32>
    %cst_5 = arith.constant 0.000000e+00 : f32
    %6 = vector.broadcast %cst_5 : f32 to vector<32x128xf32>
    %7 = arith.maximumf %5, %6 : vector<32x128xf32>
    %8 = arith.truncf %7 : vector<32x128xf32> to vector<32x128xbf16>
    %c0_6 = arith.constant 0 : index
    %c0_7 = arith.constant 0 : index
    %9 = vector.load %arg4[%c0_6, %c0_7] : memref<64x32xbf16, #tpu.memory_space<vmem>>, vector<64x32xbf16>
    %c0_8 = arith.constant 0 : index
    %c0_9 = arith.constant 0 : index
    %10 = vector.load %arg5[%c0_8, %c0_9] : memref<64x1xf32, #tpu.memory_space<vmem>>, vector<64x1xf32>
    %cst_10 = arith.constant dense<0.000000e+00> : vector<64x128xf32>
    %11 = tpu.matmul %9, %8, %cst_10 {dimension_numbers = #tpu.dot_dimension_numbers<[1], [0], [0], [1], [0, 0, 1, 1], [], []>} : vector<64x32xbf16>, vector<32x128xbf16>, vector<64x128xf32> -> vector<64x128xf32>
    %12 = vector.broadcast %10 : vector<64x1xf32> to vector<64x128xf32>
    %13 = arith.addf %11, %12 : vector<64x128xf32>
    %cst_11 = arith.constant 0.000000e+00 : f32
    %14 = vector.broadcast %cst_11 : f32 to vector<64x128xf32>
    %15 = arith.maximumf %13, %14 : vector<64x128xf32>
    %16 = arith.truncf %15 : vector<64x128xf32> to vector<64x128xbf16>
    %c0_12 = arith.constant 0 : index
    %c0_13 = arith.constant 0 : index
    %17 = vector.load %arg6[%c0_12, %c0_13] : memref<4x64xbf16, #tpu.memory_space<vmem>>, vector<4x64xbf16>
    %c0_14 = arith.constant 0 : index
    %c0_15 = arith.constant 0 : index
    %18 = vector.load %arg7[%c0_14, %c0_15] : memref<4x1xf32, #tpu.memory_space<vmem>>, vector<4x1xf32>
    %cst_16 = arith.constant dense<0.000000e+00> : vector<4x128xf32>
    %19 = tpu.matmul %17, %16, %cst_16 {dimension_numbers = #tpu.dot_dimension_numbers<[1], [0], [0], [1], [0, 0, 1, 1], [], []>} : vector<4x64xbf16>, vector<64x128xbf16>, vector<4x128xf32> -> vector<4x128xf32>
    %20 = vector.broadcast %18 : vector<4x1xf32> to vector<4x128xf32>
    %21 = arith.addf %19, %20 : vector<4x128xf32>
    %c0_17 = arith.constant 0 : index
    %c0_18 = arith.constant 0 : index
    %22 = vector.load %arg8[%c0_17, %c0_18] : memref<4x128xf32, #tpu.memory_space<vmem>>, vector<4x128xf32>
    tpu.vector_store %arg8[%c0_17, %c0_18], %21 {strides = array<i32>} : memref<4x128xf32, #tpu.memory_space<vmem>>, vector<4x128xf32>,
    return
  }
  func.func @transform_0(%arg0: i32) -> (i32, i32) {
    %c0_i32 = arith.constant 0 : i32
    %c0_i32_0 = arith.constant 0 : i32
    return %c0_i32, %arg0 : i32, i32
  }
  func.func @transform_1(%arg0: i32) -> (i32, i32) {
    %c0_i32 = arith.constant 0 : i32
    %c0_i32_0 = arith.constant 0 : i32
    %c0_i32_1 = arith.constant 0 : i32
    return %c0_i32, %c0_i32_0 : i32, i32
  }
  func.func @transform_2(%arg0: i32) -> (i32, i32) {
    %c0_i32 = arith.constant 0 : i32
    %c0_i32_0 = arith.constant 0 : i32
    %c0_i32_1 = arith.constant 0 : i32
    return %c0_i32, %c0_i32_0 : i32, i32
  }
  func.func @transform_3(%arg0: i32) -> (i32, i32) {
    %c0_i32 = arith.constant 0 : i32
    %c0_i32_0 = arith.constant 0 : i32
    %c0_i32_1 = arith.constant 0 : i32
    return %c0_i32, %c0_i32_0 : i32, i32
  }
  func.func @transform_4(%arg0: i32) -> (i32, i32) {
    %c0_i32 = arith.constant 0 : i32
    %c0_i32_0 = arith.constant 0 : i32
    %c0_i32_1 = arith.constant 0 : i32
    return %c0_i32, %c0_i32_0 : i32, i32
  }
  func.func @transform_5(%arg0: i32) -> (i32, i32) {
    %c0_i32 = arith.constant 0 : i32
    %c0_i32_0 = arith.constant 0 : i32
    %c0_i32_1 = arith.constant 0 : i32
    return %c0_i32, %c0_i32_0 : i32, i32
  }
  func.func @transform_6(%arg0: i32) -> (i32, i32) {
    %c0_i32 = arith.constant 0 : i32
    %c0_i32_0 = arith.constant 0 : i32
    %c0_i32_1 = arith.constant 0 : i32
    return %c0_i32, %c0_i32_0 : i32, i32
  }
  func.func @transform_7(%arg0: i32) -> (i32, i32) {
    %c0_i32 = arith.constant 0 : i32
    %c0_i32_0 = arith.constant 0 : i32
    return %c0_i32, %arg0 : i32, i32
  }
}

</mosaic_0001>

<llo_original>
// kernel: tpu_custom_call.1
$region0: #{tpu_custom_call.1}
  #allocation0 [shape = 'u32[]', space=smem, size = 0x4, offset = 0x4, fixed_abs, tag = 'smem constant byte address 0x4 - core index']
  #allocation1 [shape = 'u32[72,128]{1,0:T(1,128)}', space=vmem, size = 0x9000, scoped, tag = 'internal scratch']
  %s0 = inlined_call_operand.vmem [shape: bf16[16,256], index: 0, kind: input, shape index: {}]
  %s1 = inlined_call_operand.vmem [shape: bf16[32,16], index: 1, kind: input, shape index: {}]
  %s2 = inlined_call_operand.vmem [shape: f32[32,1], index: 2, kind: input, shape index: {}]
  %s3 = inlined_call_operand.vmem [shape: bf16[64,32], index: 3, kind: input, shape index: {}]
  %s4 = inlined_call_operand.vmem [shape: f32[64,1], index: 4, kind: input, shape index: {}]
  %s5 = inlined_call_operand.vmem [shape: bf16[4,64], index: 5, kind: input, shape index: {}]
  %s6 = inlined_call_operand.vmem [shape: f32[4,1], index: 6, kind: input, shape index: {}]
  %s7 = inlined_call_operand.hbm [shape: f32[4,256], index: 7, kind: output, shape index: {}]
  %s8 = sld [smem:[#allocation0]]
  $region102: #{tpu_custom_call.1} parent=0
    _
  %s10 = ssub.s32 1, %s8
  %s11 = scalar_select 0, %s10, %s8
  $region1: #{tpu_custom_call.1} parent=0
    #allocation2 [shape = 'u8[8192]{0}', space=vmem, size = 0x2000, scoped, tag = 'input window, operand 0']
    #allocation3 [shape = 'u8[4096]{0}', space=vmem, size = 0x1000, scoped, tag = 'output window, operand 0']
    #allocation4 [shape = 's32[2]{0}', space=sflag, size = 0x8, scoped, tag = 'scoped memory for tpu_custom_call.1']
    %12 = vsyncpa [#allocation4], 0
    %s13 = scalar_lea.sflag [#allocation4], 1
    %14 = vsyncpa %s13, 0
    loop: start=0, step=1, limit=4
    $region2: #{tpu_custom_call.1} parent=1 // loop_pre_header
      _
    $region3: #{tpu_custom_call.1} parent=1 // loop_header
      %s16 = sphi 0, %s20
      %p17 = scmp.ge.s32.totalorder %s16, 4
      %s26 = sphi 0, %s28
      %s29 = sphi 0, %s26
      %s30 = sphi 0, %s29
      %s46 = sphi 0, %s30
      %s50 = sphi 0, %s50
      %s52 = sphi 0, %s50
      %s53 = sphi 0, %s52
      %s67 = sphi 0, %s53
      %s71 = sphi 0, %s71
      %s73 = sphi 0, %s71
      %s74 = sphi 0, %s73
      %s88 = sphi 0, %s74
      %s92 = sphi 0, %s92
      %s94 = sphi 0, %s92
      %s95 = sphi 0, %s94
      %s109 = sphi 0, %s95
      %s113 = sphi 0, %s113
      %s115 = sphi 0, %s113
      %s116 = sphi 0, %s115
      %s130 = sphi 0, %s116
      %s134 = sphi 0, %s134
      %s136 = sphi 0, %s134
      %s137 = sphi 0, %s136
      %s151 = sphi 0, %s137
      %s155 = sphi 0, %s155
      %s157 = sphi 0, %s155
      %s158 = sphi 0, %s157
      %s172 = sphi 0, %s158
      %s178 = sphi 0, %s180
      %s181 = sphi 0, %s178
      %s182 = sphi 0, %s181
      %s198 = sphi 0, %s182
    $region4: #{tpu_custom_call.1} parent=1 // loop_header_branch
      %19 = sbr.rel (%p17) target = $region8
    $region5: #{tpu_custom_call.1} parent=1 // loop_body
      %s21 = ssub.s32 %s16, 1
      %s22 = ssub.s32 %s16, 2
      %s23 = sadd.s32 %s16, 1
      %s24 = ssub.s32 %s16, %s23
      %p25 = scmp.eq.s32.totalorder %s24, 0
      %s27 = sadd.s32 %s26, 1
      %s28 = scalar_select %p25, %s26, %s27
      %p31 = pneg %p25
      %p32 = scmp.eq.s32.totalorder %s16, 1
      %p33 = por %p31, %p32
      %p34 = scmp.ne.s32.totalorder %s26, %s29
      %p35 = scmp.eq.s32.totalorder %s16, 0
      %p36 = por %p34, %p35
      %p37 = scmp.ne.s32.totalorder %s26, %s29
      %p38 = scmp.eq.s32.totalorder %s21, 1
      %p39 = por %p37, %p38
      %p40 = scmp.ne.s32.totalorder %s29, %s30
      %p41 = scmp.eq.s32.totalorder %s21, 0
      %p42 = por %p40, %p41
      %p43 = scmp.ne.s32.totalorder %s29, %s30
      %p44 = scmp.eq.s32.totalorder %s22, 1
      %p45 = por %p43, %p44
      %p47 = scmp.ne.s32.totalorder %s30, %s46
      %p48 = scmp.eq.s32.totalorder %s22, 0
      %p49 = por %p47, %p48
      %s51 = sadd.s32 %s50, 1
      %p54 = scmp.eq.s32.totalorder %s16, 1
      %p55 = scmp.ne.s32.totalorder %s50, %s52
      %p56 = scmp.eq.s32.totalorder %s16, 0
      %p57 = por %p55, %p56
      %p58 = scmp.ne.s32.totalorder %s50, %s52
      %p59 = scmp.eq.s32.totalorder %s21, 1
      %p60 = por %p58, %p59
      %p61 = scmp.ne.s32.totalorder %s52, %s53
      %p62 = scmp.eq.s32.totalorder %s21, 0
      %p63 = por %p61, %p62
      %p64 = scmp.ne.s32.totalorder %s52, %s53
      %p65 = scmp.eq.s32.totalorder %s22, 1
      %p66 = por %p64, %p65
      %p68 = scmp.ne.s32.totalorder %s53, %s67
      %p69 = scmp.eq.s32.totalorder %s22, 0
      %p70 = por %p68, %p69
      %s72 = sadd.s32 %s71, 1
      %p75 = scmp.eq.s32.totalorder %s16, 1
      %p76 = scmp.ne.s32.totalorder %s71, %s73
      %p77 = scmp.eq.s32.totalorder %s16, 0
      %p78 = por %p76, %p77
      %p79 = scmp.ne.s32.totalorder %s71, %s73
      %p80 = scmp.eq.s32.totalorder %s21, 1
      %p81 = por %p79, %p80
      %p82 = scmp.ne.s32.totalorder %s73, %s74
      %p83 = scmp.eq.s32.totalorder %s21, 0
      %p84 = por %p82, %p83
      %p85 = scmp.ne.s32.totalorder %s73, %s74
      %p86 = scmp.eq.s32.totalorder %s22, 1
      %p87 = por %p85, %p86
      %p89 = scmp.ne.s32.totalorder %s74, %s88
      %p90 = scmp.eq.s32.totalorder %s22, 0
      %p91 = por %p89, %p90
      %s93 = sadd.s32 %s92, 1
      %p96 = scmp.eq.s32.totalorder %s16, 1
      %p97 = scmp.ne.s32.totalorder %s92, %s94
      %p98 = scmp.eq.s32.totalorder %s16, 0
      %p99 = por %p97, %p98
      %p100 = scmp.ne.s32.totalorder %s92, %s94
      %p101 = scmp.eq.s32.totalorder %s21, 1
      %p102 = por %p100, %p101
      %p103 = scmp.ne.s32.totalorder %s94, %s95
      %p104 = scmp.eq.s32.totalorder %s21, 0
      %p105 = por %p103, %p104
      %p106 = scmp.ne.s32.totalorder %s94, %s95
      %p107 = scmp.eq.s32.totalorder %s22, 1
      %p108 = por %p106, %p107
      %p110 = scmp.ne.s32.totalorder %s95, %s109
      %p111 = scmp.eq.s32.totalorder %s22, 0
      %p112 = por %p110, %p111
      %s114 = sadd.s32 %s113, 1
      %p117 = scmp.eq.s32.totalorder %s16, 1
      %p118 = scmp.ne.s32.totalorder %s113, %s115
      %p119 = scmp.eq.s32.totalorder %s16, 0
      %p120 = por %p118, %p119
      %p121 = scmp.ne.s32.totalorder %s113, %s115
      %p122 = scmp.eq.s32.totalorder %s21, 1
      %p123 = por %p121, %p122
      %p124 = scmp.ne.s32.totalorder %s115, %s116
      %p125 = scmp.eq.s32.totalorder %s21, 0
      %p126 = por %p124, %p125
      %p127 = scmp.ne.s32.totalorder %s115, %s116
      %p128 = scmp.eq.s32.totalorder %s22, 1
      %p129 = por %p127, %p128
      %p131 = scmp.ne.s32.totalorder %s116, %s130
      %p132 = scmp.eq.s32.totalorder %s22, 0
      %p133 = por %p131, %p132
      %s135 = sadd.s32 %s134, 1
      %p138 = scmp.eq.s32.totalorder %s16, 1
      %p139 = scmp.ne.s32.totalorder %s134, %s136
      %p140 = scmp.eq.s32.totalorder %s16, 0
      %p141 = por %p139, %p140
      %p142 = scmp.ne.s32.totalorder %s134, %s136
      %p143 = scmp.eq.s32.totalorder %s21, 1
      %p144 = por %p142, %p143
      %p145 = scmp.ne.s32.totalorder %s136, %s137
      %p146 = scmp.eq.s32.totalorder %s21, 0
      %p147 = por %p145, %p146
      %p148 = scmp.ne.s32.totalorder %s136, %s137
      %p149 = scmp.eq.s32.totalorder %s22, 1
      %p150 = por %p148, %p149
      %p152 = scmp.ne.s32.totalorder %s137, %s151
      %p153 = scmp.eq.s32.totalorder %s22, 0
      %p154 = por %p152, %p153
      %s156 = sadd.s32 %s155, 1
      %p159 = scmp.eq.s32.totalorder %s16, 1
      %p160 = scmp.ne.s32.totalorder %s155, %s157
      %p161 = scmp.eq.s32.totalorder %s16, 0
      %p162 = por %p160, %p161
      %p163 = scmp.ne.s32.totalorder %s155, %s157
      %p164 = scmp.eq.s32.totalorder %s21, 1
      %p165 = por %p163, %p164
      %p166 = scmp.ne.s32.totalorder %s157, %s158
      %p167 = scmp.eq.s32.totalorder %s21, 0
      %p168 = por %p166, %p167
      %p169 = scmp.ne.s32.totalorder %s157, %s158
      %p170 = scmp.eq.s32.totalorder %s22, 1
      %p171 = por %p169, %p170
      %p173 = scmp.ne.s32.totalorder %s158, %s172
      %p174 = scmp.eq.s32.totalorder %s22, 0
      %p175 = por %p173, %p174
      %s176 = ssub.s32 %s16, %s23
      %p177 = scmp.eq.s32.totalorder %s176, 0
      %s179 = sadd.s32 %s178, 1
      %s180 = scalar_select %p177, %s178, %s179
      %p183 = pneg %p177
      %p184 = scmp.eq.s32.totalorder %s16, 1
      %p185 = por %p183, %p184
      %p186 = scmp.ne.s32.totalorder %s178, %s181
      %p187 = scmp.eq.s32.totalorder %s16, 0
      %p188 = por %p186, %p187
      %p189 = scmp.ne.s32.totalorder %s178, %s181
      %p190 = scmp.eq.s32.totalorder %s21, 1
      %p191 = por %p189, %p190
      %p192 = scmp.ne.s32.totalorder %s181, %s182
      %p193 = scmp.eq.s32.totalorder %s21, 0
      %p194 = por %p192, %p193
      %p195 = scmp.ne.s32.totalorder %s181, %s182
      %p196 = scmp.eq.s32.totalorder %s22, 1
      %p197 = por %p195, %p196
      %p199 = scmp.ne.s32.totalorder %s182, %s198
      %p200 = scmp.eq.s32.totalorder %s22, 0
      %p201 = por %p199, %p200
      %p202 = scmp.le.s32.totalorder 1, %s16
      %p203 = scmp.lt.s32.totalorder %s16, 3
      %p204 = pnand %p202, %p203
      %p205 = pneg %p204
      // Predicated region
      $region9: #{tpu_custom_call.1} parent=5 // pred_check
        _
      $region10: #{tpu_custom_call.1} parent=5 // pred_check_branch
        %207 = sbr.rel (%p204) target = $region12
      $region11: #{tpu_custom_call.1} parent=5 // pred_region
        %s208 = ssub.s32 %s16, 1
        // Predicated region
        $region13: #{tpu_custom_call.1} parent=11 // pred_check
          %p209 = pneg %p63
        $region14: #{tpu_custom_call.1} parent=11 // pred_check_branch
          %211 = sbr.rel (%p209) target = $region16
        $region15: #{tpu_custom_call.1} parent=11 // pred_region
          _
        $region16: #{tpu_custom_call.1} parent=11 // pred_fallthru
          _
        // Predicated region
        $region17: #{tpu_custom_call.1} parent=11 // pred_check
          %p212 = pneg %p84
        $region18: #{tpu_custom_call.1} parent=11 // pred_check_branch
          %214 = sbr.rel (%p212) target = $region20
        $region19: #{tpu_custom_call.1} parent=11 // pred_region
          _
        $region20: #{tpu_custom_call.1} parent=11 // pred_fallthru
          _
        // Predicated region
        $region21: #{tpu_custom_call.1} parent=11 // pred_check
          %p215 = pneg %p105
        $region22: #{tpu_custom_call.1} parent=11 // pred_check_branch
          %217 = sbr.rel (%p215) target = $region24
        $region23: #{tpu_custom_call.1} parent=11 // pred_region
          _
        $region24: #{tpu_custom_call.1} parent=11 // pred_fallthru
          _
        // Predicated region
        $region25: #{tpu_custom_call.1} parent=11 // pred_check
          %p218 = pneg %p126
        $region26: #{tpu_custom_call.1} parent=11 // pred_check_branch
          %220 = sbr.rel (%p218) target = $region28
        $region27: #{tpu_custom_call.1} parent=11 // pred_region
          _
        $region28: #{tpu_custom_call.1} parent=11 // pred_fallthru
          _
        // Predicated region
        $region29: #{tpu_custom_call.1} parent=11 // pred_check
          %p221 = pneg %p147
        $region30: #{tpu_custom_call.1} parent=11 // pred_check_branch
          %223 = sbr.rel (%p221) target = $region32
        $region31: #{tpu_custom_call.1} parent=11 // pred_region
          _
        $region32: #{tpu_custom_call.1} parent=11 // pred_fallthru
          _
        // Predicated region
        $region33: #{tpu_custom_call.1} parent=11 // pred_check
          %p224 = pneg %p168
        $region34: #{tpu_custom_call.1} parent=11 // pred_check_branch
          %226 = sbr.rel (%p224) target = $region36
        $region35: #{tpu_custom_call.1} parent=11 // pred_region
          _
        $region36: #{tpu_custom_call.1} parent=11 // pred_fallthru
          _
      $region12: #{tpu_custom_call.1} parent=5 // pred_fallthru
        _
      %p227 = scmp.lt.s32.totalorder %s16, 2
      // Predicated region
      $region37: #{tpu_custom_call.1} parent=5 // pred_check
        %p228 = pneg %p227
      $region38: #{tpu_custom_call.1} parent=5 // pred_check_branch
        %230 = sbr.rel (%p228) target = $region40
      $region39: #{tpu_custom_call.1} parent=5 // pred_region
        // Predicated region
        $region41: #{tpu_custom_call.1} parent=39 // pred_check
          %p231 = pneg %p36
        $region42: #{tpu_custom_call.1} parent=39 // pred_check_branch
          %233 = sbr.rel (%p231) target = $region44
        $region43: #{tpu_custom_call.1} parent=39 // pred_region
          %s234 = sand.u32 %s26, 1
          %s235 = sand.u32 %s26, 1
          %s236 = smul.addr %s235, 8
          %s237 = scalar_lea.vmem [#allocation2], %s236
          %s238 = smul.addr %s16, 4
          %s239 = scalar_lea.vmem %s0, %s238
          // Predicated region
          $region45: #{tpu_custom_call.1} parent=43 // pred_check
            _
          $region46: #{tpu_custom_call.1} parent=43 // pred_check_branch
            %241 = sbr.rel (0) target = $region48
          $region47: #{tpu_custom_call.1} parent=43 // pred_region
            // Predicated region
            $region49: #{tpu_custom_call.1} parent=47 // pred_check
              _
            $region50: #{tpu_custom_call.1} parent=47 // pred_check_branch
              %243 = sbr.rel target = $region52
            $region51: #{tpu_custom_call.1} parent=47 // pred_region
              // Predicated region
              $region64: #{tpu_custom_call.1} parent=51 // pred_check
                _
              $region65: #{tpu_custom_call.1} parent=51 // pred_check_branch
                %261 = sbr.rel (0) target = $region67
              $region66: #{tpu_custom_call.1} parent=51 // pred_region
                loop: start=0, step=1, limit=1
                $region68: #{tpu_custom_call.1} parent=66 // loop_pre_header
                  _
                $region69: #{tpu_custom_call.1} parent=66 // loop_header
                  %s263 = sphi 0, %s267
                  %p264 = scmp.ge.s32.totalorder %s263, 1
                  %s268 = sphi %s239, %s239
                  %s269 = sphi %s237, %s237
                $region70: #{tpu_custom_call.1} parent=66 // loop_header_branch
                  %266 = sbr.rel (%p264) target = $region74
                $region71: #{tpu_custom_call.1} parent=66 // loop_body
                  _
                $region72: #{tpu_custom_call.1} parent=66 // loop_footer
                  %s267 = sadd.s32 1, %s263
                $region73: #{tpu_custom_call.1} parent=66 // loop_footer_branch
                  %262 = sbr.rel target = $region69
                $region74: #{tpu_custom_call.1} parent=66 // loop_exit
                  _
                %s271 = ssub.s32 16, 1
                loop: start=0, step=1, limit=1
                $region75: #{tpu_custom_call.1} parent=66 // loop_pre_header
                  _
                $region76: #{tpu_custom_call.1} parent=66 // loop_header
                  %s273 = sphi 0, %s277
                  %p274 = scmp.ge.s32.totalorder %s273, 1
                  %s278 = sphi %s239, %s239
                  %s279 = sphi %s237, %s237
                $region77: #{tpu_custom_call.1} parent=66 // loop_header_branch
                  %276 = sbr.rel (%p274) target = $region81
                $region78: #{tpu_custom_call.1} parent=66 // loop_body
                  %v280 = vld [vmem:[%s278] sm:%s271]
                  %281 = vst [vmem:[%s279] sm:%s271] %v280
                  %v282 = vld [vmem:[%s278 + $0x8] sm:%s271]
                  %283 = vst [vmem:[%s279 + $0x4] sm:%s271] %v282
                $region79: #{tpu_custom_call.1} parent=66 // loop_footer
                  %s277 = sadd.s32 1, %s273
                $region80: #{tpu_custom_call.1} parent=66 // loop_footer_branch
                  %272 = sbr.rel target = $region76
                $region81: #{tpu_custom_call.1} parent=66 // loop_exit
                  _
              $region67: #{tpu_custom_call.1} parent=51 // pred_fallthru
                _
            $region52: #{tpu_custom_call.1} parent=47 // pred_fallthru
              _
            // Predicated region
            $region53: #{tpu_custom_call.1} parent=47 // pred_check
              _
            $region54: #{tpu_custom_call.1} parent=47 // pred_check_branch
              %245 = sbr.rel (0) target = $region56
            $region55: #{tpu_custom_call.1} parent=47 // pred_region
              %s247 = ssub.s32 16, 1
              loop: start=0, step=1, limit=1
              $region57: #{tpu_custom_call.1} parent=55 // loop_pre_header
                _
              $region58: #{tpu_custom_call.1} parent=55 // loop_header
                %s249 = sphi 0, %s253
                %p250 = scmp.ge.s32.totalorder %s249, 1
                %s254 = sphi %s239, %s239
                %s255 = sphi %s237, %s237
              $region59: #{tpu_custom_call.1} parent=55 // loop_header_branch
                %252 = sbr.rel (%p250) target = $region63
              $region60: #{tpu_custom_call.1} parent=55 // loop_body
                %v256 = vld [vmem:[%s254] sm:%s247]
                %257 = vst [vmem:[%s255] sm:%s247] %v256
                %v258 = vld [vmem:[%s254 + $0x8] sm:%s247]
                %259 = vst [vmem:[%s255 + $0x4] sm:%s247] %v258
              $region61: #{tpu_custom_call.1} parent=55 // loop_footer
                %s253 = sadd.s32 1, %s249
              $region62: #{tpu_custom_call.1} parent=55 // loop_footer_branch
                %248 = sbr.rel target = $region58
              $region63: #{tpu_custom_call.1} parent=55 // loop_exit
                _
            $region56: #{tpu_custom_call.1} parent=47 // pred_fallthru
              _
          $region48: #{tpu_custom_call.1} parent=43 // pred_fallthru
            _
          %284 = vnop
        $region44: #{tpu_custom_call.1} parent=39 // pred_fallthru
          _
      $region40: #{tpu_custom_call.1} parent=5 // pred_fallthru
        _
      %p285 = scmp.le.s32.totalorder 1, %s16
      %p286 = scmp.lt.s32.totalorder %s16, 3
      %p287 = pnand %p285, %p286
      %p288 = pneg %p287
      // Predicated region
      $region82: #{tpu_custom_call.1} parent=5 // pred_check
        _
      $region83: #{tpu_custom_call.1} parent=5 // pred_check_branch
        %290 = sbr.rel (%p287) target = $region85
      $region84: #{tpu_custom_call.1} parent=5 // pred_region
        %s291 = ssub.s32 %s16, 1
        %s292 = sand.u32 %s29, 1
        %s293 = sand.u32 %s29, 1
        %s294 = smul.addr %s293, 8
        %s295 = scalar_lea.vmem [#allocation2], %s294
        // Predicated region
        $region86: #{tpu_custom_call.1} parent=84 // pred_check
          %p296 = pneg %p42
        $region87: #{tpu_custom_call.1} parent=84 // pred_check_branch
          %298 = sbr.rel (%p296) target = $region89
        $region88: #{tpu_custom_call.1} parent=84 // pred_region
          _
        $region89: #{tpu_custom_call.1} parent=84 // pred_fallthru
          _
        %s299 = sand.u32 %s29, 1
        %s300 = sand.u32 %s29, 1
        %s301 = smul.addr %s300, 8
        %s302 = scalar_lea.vmem [#allocation2], %s301
        %p303 = pneg %p42
        %p304 = pneg %p39
        %p305 = pneg %p63
        %p306 = pneg %p60
        %p307 = pneg %p84
        %p308 = pneg %p81
        %p309 = pneg %p105
        %p310 = pneg %p102
        %p311 = pneg %p126
        %p312 = pneg %p123
        %p313 = pneg %p147
        %p314 = pneg %p144
        %p315 = pneg %p168
        %p316 = pneg %p165
        %p317 = pneg %p194
        %p318 = pneg %p191
        %s319 = sand.u32 %s181, 1
        %s320 = scalar_lea.sflag [#allocation4], %s319
        %s321 = sand.u32 %s181, 1
        %s322 = smul.addr %s321, 4
        %s323 = scalar_lea.vmem [#allocation3], %s322
        %v325 = vld [vmem:[%s295] sm:$0xf]
        %v326 = vld [vmem:[%s295 + $0x4] sm:$0xf]
        %v327 = vld [vmem:[%s1] sm:$0xf]
        %v328 = vld [vmem:[%s1 + $0x4] sm:$0xf]
        %v329 = vld [vmem:[%s1 + $0x8] sm:$0xf]
        %v330 = vld [vmem:[%s1 + $0xc] sm:$0xf]
        %v331 = vld [vmem:[%s2] sm:$0xff]
        %v332 = vld [vmem:[%s2 + $0x8] sm:$0xff]
        %v333 = vld [vmem:[%s2 + $0x10] sm:$0xff]
        %v334 = vld [vmem:[%s2 + $0x18] sm:$0xff]
        %336 = vset.pattern.permute.xlu0 0
        %337 = vperm.xlu0 %336, %v331
        %v338 = vpop.permute.xlu0 %337
        %341 = vset.pattern.permute.xlu0 0
        %342 = vperm.xlu0 %341, %v332
        %v343 = vpop.permute.xlu0 %342
        %346 = vset.pattern.permute.xlu0 0
        %347 = vperm.xlu0 %346, %v333
        %v348 = vpop.permute.xlu0 %347
        %351 = vset.pattern.permute.xlu0 0
        %352 = vperm.xlu0 %351, %v334
        %v353 = vpop.permute.xlu0 %352
        %v359 = vunpack.c.l.b16 %v327
        %v360 = vunpack.c.l.b16 %v328
        %v361 = vunpack.c.l.b16 %v329
        %v362 = vunpack.c.l.b16 %v330
        %v363 = vpack.c.b16 %v360, %v359
        %v364 = vpack.c.b16 %v362, %v361
        %v367 = vunpack.c.l.b16 %v325
        %v368 = vunpack.c.l.b16 %v326
        %v369 = vpack.c.b16 %v368, %v367
        %vm371 = vcmask 130048
        %v373 = vsel %vm371, %v363, 0
        %v376 = vsel %vm371, %v364, 0
        %378 = vmatpush.bf16.msra.mxu0 0
        %379 = vmatpush.bf16.msra.mxu0 0
        %380 = vmatpush.bf16.msra.mxu0 0
        %381 = vmatpush.bf16.msra.mxu0 0
        %382 = vmatpush.bf16.msra.mxu0 0
        %383 = vmatpush.bf16.msra.mxu0 0
        %384 = vmatpush.bf16.msra.mxu0 0
        %385 = vmatpush.bf16.msra.mxu0 %v369
        %386 = vmatmul.bf16.gmra.mxu0 %v373
        %v387 = vpop.f32.mrf.mxu0
        %v388 = vadd.f32 %v338, %v387
        %v389 = vpop.f32.mrf.mxu0
        %v390 = vadd.f32 %v343, %v389
        %391 = vmatmul.bf16.gmra.mxu0 %v376
        %v392 = vpop.f32.mrf.mxu0
        %v393 = vadd.f32 %v348, %v392
        %v394 = vpop.f32.mrf.mxu0
        %v395 = vadd.f32 %v353, %v394
        %396 = vdwg.mxu0
        %v397 = vmax.f32 %v388, 0.0
        %v398 = vmax.f32 %v390, 0.0
        %v399 = vmax.f32 %v393, 0.0
        %v400 = vmax.f32 %v395, 0.0
        %v401 = vpack.c.bf16 %v398, %v397
        %v402 = vpack.c.bf16 %v400, %v399
        %v403 = vld [vmem:[%s3] sm:$0xf]
        %v404 = vld [vmem:[%s3 + $0x4] sm:$0xf]
        %v405 = vld [vmem:[%s3 + $0x8] sm:$0xf]
        %v406 = vld [vmem:[%s3 + $0xc] sm:$0xf]
        %v407 = vld [vmem:[%s3 + $0x10] sm:$0xf]
        %v408 = vld [vmem:[%s3 + $0x14] sm:$0xf]
        %v409 = vld [vmem:[%s3 + $0x18] sm:$0xf]
        %v410 = vld [vmem:[%s3 + $0x1c] sm:$0xf]
        %v411 = vld [vmem:[%s4] sm:$0xff]
        %v412 = vld [vmem:[%s4 + $0x8] sm:$0xff]
        %v413 = vld [vmem:[%s4 + $0x10] sm:$0xff]
        %v414 = vld [vmem:[%s4 + $0x18] sm:$0xff]
        %v415 = vld [vmem:[%s4 + $0x20] sm:$0xff]
        %v416 = vld [vmem:[%s4 + $0x28] sm:$0xff]
        %v417 = vld [vmem:[%s4 + $0x30] sm:$0xff]
        %v418 = vld [vmem:[%s4 + $0x38] sm:$0xff]
        %420 = vset.pattern.permute.xlu0 0
        %421 = vperm.xlu0 %420, %v411
        %v422 = vpop.permute.xlu0 %421
        %425 = vset.pattern.permute.xlu0 0
        %426 = vperm.xlu0 %425, %v412
        %v427 = vpop.permute.xlu0 %426
        %430 = vset.pattern.permute.xlu0 0
        %431 = vperm.xlu0 %430, %v413
        %v432 = vpop.permute.xlu0 %431
        %435 = vset.pattern.permute.xlu0 0
        %436 = vperm.xlu0 %435, %v414
        %v437 = vpop.permute.xlu0 %436
        %440 = vset.pattern.permute.xlu0 0
        %441 = vperm.xlu0 %440, %v415
        %v442 = vpop.permute.xlu0 %441
        %445 = vset.pattern.permute.xlu0 0
        %446 = vperm.xlu0 %445, %v416
        %v447 = vpop.permute.xlu0 %446
        %450 = vset.pattern.permute.xlu0 0
        %451 = vperm.xlu0 %450, %v417
        %v452 = vpop.permute.xlu0 %451
        %455 = vset.pattern.permute.xlu0 0
        %456 = vperm.xlu0 %455, %v418
        %v457 = vpop.permute.xlu0 %456
        %v467 = vunpack.c.l.b16 %v403
        %v468 = vunpack.c.l.b16 %v404
        %v469 = vunpack.c.l.b16 %v405
        %v470 = vunpack.c.l.b16 %v406
        %v471 = vunpack.c.l.b16 %v407
        %v472 = vunpack.c.l.b16 %v408
        %v473 = vunpack.c.l.b16 %v409
        %v474 = vunpack.c.l.b16 %v410
        %v475 = vpack.c.b16 %v468, %v467
        %v476 = vpack.c.b16 %v470, %v469
        %v477 = vpack.c.b16 %v472, %v471
        %v478 = vpack.c.b16 %v474, %v473
        %vm479 = vcmask 261120
        %v481 = vsel %vm479, %v475, 0
        %v484 = vsel %vm479, %v476, 0
        %v487 = vsel %vm479, %v477, 0
        %v490 = vsel %vm479, %v478, 0
        %492 = vmatpush.bf16.msra.mxu0 0
        %493 = vmatpush.bf16.msra.mxu0 0
        %494 = vmatpush.bf16.msra.mxu0 0
        %495 = vmatpush.bf16.msra.mxu0 0
        %496 = vmatpush.bf16.msra.mxu0 0
        %497 = vmatpush.bf16.msra.mxu0 0
        %498 = vmatpush.bf16.msra.mxu0 %v402
        %499 = vmatpush.bf16.msra.mxu0 %v401
        %500 = vmatmul.bf16.gmra.mxu0 %v481
        %v501 = vpop.f32.mrf.mxu0
        %v502 = vadd.f32 %v422, %v501
        %v503 = vpop.f32.mrf.mxu0
        %v504 = vadd.f32 %v427, %v503
        %505 = vmatmul.bf16.gmra.mxu0 %v484
        %v506 = vpop.f32.mrf.mxu0
        %v507 = vadd.f32 %v432, %v506
        %v508 = vpop.f32.mrf.mxu0
        %v509 = vadd.f32 %v437, %v508
        %510 = vmatmul.bf16.gmra.mxu0 %v487
        %v511 = vpop.f32.mrf.mxu0
        %v512 = vadd.f32 %v442, %v511
        %v513 = vpop.f32.mrf.mxu0
        %v514 = vadd.f32 %v447, %v513
        %515 = vmatmul.bf16.gmra.mxu0 %v490
        %v516 = vpop.f32.mrf.mxu0
        %v517 = vadd.f32 %v452, %v516
        %v518 = vpop.f32.mrf.mxu0
        %v519 = vadd.f32 %v457, %v518
        %520 = vdwg.mxu0
        %v521 = vmax.f32 %v502, 0.0
        %v522 = vmax.f32 %v504, 0.0
        %v523 = vmax.f32 %v507, 0.0
        %v524 = vmax.f32 %v509, 0.0
        %v525 = vmax.f32 %v512, 0.0
        %v526 = vmax.f32 %v514, 0.0
        %v527 = vmax.f32 %v517, 0.0
        %v528 = vmax.f32 %v519, 0.0
        %v529 = vpack.c.bf16 %v522, %v521
        %v530 = vpack.c.bf16 %v524, %v523
        %v531 = vpack.c.bf16 %v526, %v525
        %v532 = vpack.c.bf16 %v528, %v527
        %v533 = vld [vmem:[%s5] sm:$0x3]
        %v534 = vld [vmem:[%s6] sm:$0xf]
        %536 = vset.pattern.permute.xlu0 0
        %537 = vperm.xlu0 %536, %v534
        %v538 = vpop.permute.xlu0 %537
        %vm540 = vcmask 523264
        %v542 = vsel %vm540, %v533, 0
        %544 = vmatpush.bf16.msra.mxu0 0
        %545 = vmatpush.bf16.msra.mxu0 0
        %546 = vmatpush.bf16.msra.mxu0 0
        %547 = vmatpush.bf16.msra.mxu0 0
        %548 = vmatpush.bf16.msra.mxu0 %v532
        %549 = vmatpush.bf16.msra.mxu0 %v531
        %550 = vmatpush.bf16.msra.mxu0 %v530
        %551 = vmatpush.bf16.msra.mxu0 %v529
        %552 = vmatmul.bf16.gmra.mxu0 %v542
        %v553 = vpop.f32.mrf.mxu0
        %v554 = vadd.f32 %v538, %v553
        %v555 = vpop.f32.mrf.mxu0
        %556 = vdwg.mxu0
        %557 = vst [vmem:[%s323] sm:$0xf] %v554
        %s558 = sand.u32 %s181, 1
        %s559 = scalar_lea.sflag [#allocation4], %s558
        %s560 = sand.u32 %s181, 1
        %s561 = smul.addr %s560, 4
        %s562 = scalar_lea.vmem [#allocation3], %s561
        // Predicated region
        $region90: #{tpu_custom_call.1} parent=84 // pred_check
          %p563 = pneg %p191
        $region91: #{tpu_custom_call.1} parent=84 // pred_check_branch
          %565 = sbr.rel (%p563) target = $region93
        $region92: #{tpu_custom_call.1} parent=84 // pred_region
          %567 = vsyncadd %s559, 0
          %s568 = smul.addr %s21, 4
          %s569 = scalar_lea.hbm %s7, %s568
          %s571 = sshll.u32 %s562, 4
          %s572 = int_to_ptr.vmem [resolvable:$true] %s571
          %s573 = sshll.u32 %s569, 4
          %s574 = int_to_ptr.hbm [resolvable:$true] %s573
          %576 = dma.vmem_to_hbm [thread:$0]  %s572, 64, %s574, %s559
        $region93: #{tpu_custom_call.1} parent=84 // pred_fallthru
          _
      $region85: #{tpu_custom_call.1} parent=5 // pred_fallthru
        _
      %p577 = scmp.le.s32.totalorder 2, %s16
      // Predicated region
      $region94: #{tpu_custom_call.1} parent=5 // pred_check
        %p578 = pneg %p577
      $region95: #{tpu_custom_call.1} parent=5 // pred_check_branch
        %580 = sbr.rel (%p578) target = $region97
      $region96: #{tpu_custom_call.1} parent=5 // pred_region
        %s581 = ssub.s32 %s16, 2
        // Predicated region
        $region98: #{tpu_custom_call.1} parent=96 // pred_check
          %p582 = pneg %p197
        $region99: #{tpu_custom_call.1} parent=96 // pred_check_branch
          %584 = sbr.rel (%p582) target = $region101
        $region100: #{tpu_custom_call.1} parent=96 // pred_region
          %s585 = sand.u32 %s182, 1
          %s586 = scalar_lea.sflag [#allocation4], %s585
          %s587 = sand.u32 %s182, 1
          %s588 = smul.addr %s587, 4
          %s589 = scalar_lea.vmem [#allocation3], %s588
          %591 = dma.done %s586, 64
        $region101: #{tpu_custom_call.1} parent=96 // pred_fallthru
          _
      $region97: #{tpu_custom_call.1} parent=5 // pred_fallthru
        _
    $region6: #{tpu_custom_call.1} parent=1 // loop_footer
      %s20 = sadd.s32 1, %s16
    $region7: #{tpu_custom_call.1} parent=1 // loop_footer_branch
      %15 = sbr.rel target = $region3
    $region8: #{tpu_custom_call.1} parent=1 // loop_exit
      _
    %592 = vsyncpa [#allocation4], 1
    %s593 = scalar_lea.sflag [#allocation4], 1
    %594 = vsyncpa %s593, 1

</llo_original>
